<compile_context>
chip_gen: v7x
topology: tpu7x:2x2x1
jax: 0.10.0
libtpu: 0.0.40
codegen_flags: <defaults>
</compile_context>

<pallas_src>
import jax
import jax.numpy as jnp
from jax.experimental import pallas as pl
from jax.experimental.pallas import tpu as pltpu


def _fused_conv_kernel(x_ref, w1_ref, b1_ref, w2_ref, b2_ref, w3_ref, b3_ref, o_ref):
    # x_ref: (Cin, TM)   weights: (Cout_l, Cin_l)   biases: (Cout_l, 1)
    # All three channel mixes happen on the same VMEM-resident M-tile.
    x = x_ref[...]
    h = jnp.dot(w1_ref[...], x, preferred_element_type=jnp.float32) + b1_ref[...]
    h = jnp.dot(w2_ref[...], h, preferred_element_type=jnp.float32) + b2_ref[...]
    y = jnp.dot(w3_ref[...], h, preferred_element_type=jnp.float32) + b3_ref[...]
    o_ref[...] = y.astype(o_ref.dtype)


def fused_pointwise_convs(x_ncm, w1, b1, w2, b2, w3, b3, *, max_tile=2048):
    """Apply three chained 1x1 convs (channel matmuls) to (N, Cin, M) input.

    Returns (N, Cout3, M) float32. M is the (already spatially-subsampled)
    pixel count per batch element; it maps to the TPU lane axis.
    """
    n, cin, m = x_ncm.shape
    c1, c2, c3 = w1.shape[0], w2.shape[0], w3.shape[0]

    # Tile M: whole extent if small (legal: block == full dim), otherwise a
    # 128-aligned tile sized conservatively for v7x's 64 MiB VMEM
    # (double-buffered in+out blocks stay well under 1 MiB for small Cin).
    if m <= max_tile:
        tm, m_pad = m, m
        x_in = x_ncm
    else:
        tm = max_tile  # multiple of 128
        m_pad = ((m + tm - 1) // tm) * tm
        x_in = jnp.pad(x_ncm, ((0, 0), (0, 0), (0, m_pad - m))) if m_pad != m else x_ncm

    grid = (n, m_pad // tm)

    out = pl.pallas_call(
        _fused_conv_kernel,
        out_shape=jax.ShapeDtypeStruct((n, c3, m_pad), jnp.float32),
        grid_spec=pl.GridSpec(
            grid=grid,
            in_specs=[
                # activations: batch dim squeezed, (Cin, TM) per step
                pl.BlockSpec((None, cin, tm), lambda b, i: (b, 0, i)),
                # weights / biases: tiny, VMEM-resident across the whole grid
                pl.BlockSpec((c1, cin), lambda b, i: (0, 0)),
                pl.BlockSpec((c1, 1), lambda b, i: (0, 0)),
                pl.BlockSpec((c2, c1), lambda b, i: (0, 0)),
                pl.BlockSpec((c2, 1), lambda b, i: (0, 0)),
                pl.BlockSpec((c3, c2), lambda b, i: (0, 0)),
                pl.BlockSpec((c3, 1), lambda b, i: (0, 0)),
            ],
            out_specs=pl.BlockSpec((None, c3, tm), lambda b, i: (b, 0, i)),
        ),
        compiler_params=pltpu.CompilerParams(
            dimension_semantics=("parallel", "parallel"),
        ),
    )(
        x_in,
        w1, b1.reshape(c1, 1),
        w2, b2.reshape(c2, 1),
        w3, b3.reshape(c3, 1),
    )
    return out[:, :, :m] if m_pad != m else out


class SmallConvNetPallas:
    """Three 1x1 conv layers: (Cin->8, s=1), (8->4, s=2), (4->2, s=2)."""

    def __init__(self, input_dim: int, key):
        conv_dim1, conv_dim2, conv_dim3 = 8, 4, 2
        ks = jax.random.split(key, 6)

        def init_layer(kw, kb, cin, cout):
            # PyTorch-style uniform fan-in init (kernel_size=1 -> fan_in = cin)
            bound = 1.0 / jnp.sqrt(cin)
            w = jax.random.uniform(kw, (cout, cin), jnp.float32, -bound, bound)
            b = jax.random.uniform(kb, (cout,), jnp.float32, -bound, bound)
            return w, b

        self.w1, self.b1 = init_layer(ks[0], ks[1], input_dim, conv_dim1)
        self.w2, self.b2 = init_layer(ks[2], ks[3], conv_dim1, conv_dim2)
        self.w3, self.b3 = init_layer(ks[4], ks[5], conv_dim2, conv_dim3)

    def __call__(self, x):
        # x: (N, Cin, H, W) NCHW.
        # With 1x1 kernels, stride 1 then 2 then 2 == a ::4 spatial selection,
        # so only DMA/compute the pixels that reach the output. Exact here
        # because there is no nonlinearity between layers.
        # TODO(synk): if activations are ever added between layers, keep the
        # structural fusion but move the stride-2 subsampling back between the
        # matmuls inside the kernel.
        xs = x[:, :, ::4, ::4]
        n, c, h4, w4 = xs.shape
        x_ncm = xs.reshape(n, c, h4 * w4)  # channels->sublanes, pixels->lanes
        y = fused_pointwise_convs(
            x_ncm, self.w1, self.b1, self.w2, self.b2, self.w3, self.b3
        )
        return y.reshape(n, self.w3.shape[0], h4, w4)


if __name__ == "__main__":
    key = jax.random.PRNGKey(0)
    k_param, k_x = jax.random.split(key)

    N, C, H, W = 2, 4, 16, 16
    x = jax.random.normal(k_x, (N, C, H, W), jnp.float32)

    model = SmallConvNetPallas(input_dim=C, key=k_param)
    y = jax.block_until_ready(model(x))

    assert y.shape == (N, 2, H // 4, W // 4), y.shape

    # Reference check against plain-JAX per-layer 1x1 conv math.
    def ref_conv(xx, w, b, s):
        xx = xx[:, :, ::s, ::s]
        return jnp.einsum("nchw,oc->nohw", xx, w) + b[None, :, None, None]

    r = ref_conv(x, model.w1, model.b1, 1)
    r = ref_conv(r, model.w2, model.b2, 2)
    r = ref_conv(r, model.w3, model.b3, 2)
    assert jnp.allclose(y, r, atol=1e-5, rtol=1e-5)

    print("KERNEL_OK")
</pallas_src>

<mosaic_0001>
module attributes {stable_mosaic.version = 11 : i64} {
  func.func @_fused_conv_kernel(%arg0: i32, %arg1: i32, %arg2: memref<1x4x16xf32, #tpu.memory_space<vmem>>, %arg3: memref<8x4xf32, #tpu.memory_space<vmem>>, %arg4: memref<8x1xf32, #tpu.memory_space<vmem>>, %arg5: memref<4x8xf32, #tpu.memory_space<vmem>>, %arg6: memref<4x1xf32, #tpu.memory_space<vmem>>, %arg7: memref<2x4xf32, #tpu.memory_space<vmem>>, %arg8: memref<2x1xf32, #tpu.memory_space<vmem>>, %arg9: memref<1x2x16xf32, #tpu.memory_space<vmem>>) attributes {dimension_semantics = [#tpu.dimension_semantics<parallel>, #tpu.dimension_semantics<parallel>], iteration_bounds = array<i64: 2, 1>, scalar_prefetch = 0 : i64, scratch_operands = 0 : i64, tpu.core_type = #tpu.core_type<tc>, window_params = [{transform_indices = @transform_0, window_bounds = array<i64: 1, 4, 16>}, {pipeline_mode = #tpu.pipeline_mode<synchronous>, transform_indices = @transform_1, window_bounds = array<i64: 8, 4>}, {pipeline_mode = #tpu.pipeline_mode<synchronous>, transform_indices = @transform_2, window_bounds = array<i64: 8, 1>}, {pipeline_mode = #tpu.pipeline_mode<synchronous>, transform_indices = @transform_3, window_bounds = array<i64: 4, 8>}, {pipeline_mode = #tpu.pipeline_mode<synchronous>, transform_indices = @transform_4, window_bounds = array<i64: 4, 1>}, {pipeline_mode = #tpu.pipeline_mode<synchronous>, transform_indices = @transform_5, window_bounds = array<i64: 2, 4>}, {pipeline_mode = #tpu.pipeline_mode<synchronous>, transform_indices = @transform_6, window_bounds = array<i64: 2, 1>}, {transform_indices = @transform_7, window_bounds = array<i64: 1, 2, 16>}]} {
    %c0 = arith.constant 0 : index
    %c0_0 = arith.constant 0 : index
    %c0_1 = arith.constant 0 : index
    %0 = vector.load %arg2[%c0, %c0_0, %c0_1] : memref<1x4x16xf32, #tpu.memory_space<vmem>>, vector<1x4x16xf32>
    %1 = vector.shape_cast %0 : vector<1x4x16xf32> to vector<4x16xf32>
    %c0_2 = arith.constant 0 : index
    %c0_3 = arith.constant 0 : index
    %2 = vector.load %arg3[%c0_2, %c0_3] : memref<8x4xf32, #tpu.memory_space<vmem>>, vector<8x4xf32>
    %cst = arith.constant dense<0.000000e+00> : vector<8x16xf32>
    %3 = tpu.matmul %2, %1, %cst {dimension_numbers = #tpu.dot_dimension_numbers<[1], [0], [0], [1], [0, 0, 1, 1], [], []>} : vector<8x4xf32>, vector<4x16xf32>, vector<8x16xf32> -> vector<8x16xf32>
    %c0_4 = arith.constant 0 : index
    %c0_5 = arith.constant 0 : index
    %4 = vector.load %arg4[%c0_4, %c0_5] : memref<8x1xf32, #tpu.memory_space<vmem>>, vector<8x1xf32>
    %5 = vector.broadcast %4 : vector<8x1xf32> to vector<8x16xf32>
    %6 = arith.addf %3, %5 : vector<8x16xf32>
    %c0_6 = arith.constant 0 : index
    %c0_7 = arith.constant 0 : index
    %7 = vector.load %arg5[%c0_6, %c0_7] : memref<4x8xf32, #tpu.memory_space<vmem>>, vector<4x8xf32>
    %cst_8 = arith.constant dense<0.000000e+00> : vector<4x16xf32>
    %8 = tpu.matmul %7, %6, %cst_8 {dimension_numbers = #tpu.dot_dimension_numbers<[1], [0], [0], [1], [0, 0, 1, 1], [], []>} : vector<4x8xf32>, vector<8x16xf32>, vector<4x16xf32> -> vector<4x16xf32>
    %c0_9 = arith.constant 0 : index
    %c0_10 = arith.constant 0 : index
    %9 = vector.load %arg6[%c0_9, %c0_10] : memref<4x1xf32, #tpu.memory_space<vmem>>, vector<4x1xf32>
    %10 = vector.broadcast %9 : vector<4x1xf32> to vector<4x16xf32>
    %11 = arith.addf %8, %10 : vector<4x16xf32>
    %c0_11 = arith.constant 0 : index
    %c0_12 = arith.constant 0 : index
    %12 = vector.load %arg7[%c0_11, %c0_12] : memref<2x4xf32, #tpu.memory_space<vmem>>, vector<2x4xf32>
    %cst_13 = arith.constant dense<0.000000e+00> : vector<2x16xf32>
    %13 = tpu.matmul %12, %11, %cst_13 {dimension_numbers = #tpu.dot_dimension_numbers<[1], [0], [0], [1], [0, 0, 1, 1], [], []>} : vector<2x4xf32>, vector<4x16xf32>, vector<2x16xf32> -> vector<2x16xf32>
    %c0_14 = arith.constant 0 : index
    %c0_15 = arith.constant 0 : index
    %14 = vector.load %arg8[%c0_14, %c0_15] : memref<2x1xf32, #tpu.memory_space<vmem>>, vector<2x1xf32>
    %15 = vector.broadcast %14 : vector<2x1xf32> to vector<2x16xf32>
    %16 = arith.addf %13, %15 : vector<2x16xf32>
    %c0_16 = arith.constant 0 : index
    %c0_17 = arith.constant 0 : index
    %c0_18 = arith.constant 0 : index
    %17 = vector.load %arg9[%c0_16, %c0_17, %c0_18] : memref<1x2x16xf32, #tpu.memory_space<vmem>>, vector<1x2x16xf32>
    %18 = vector.shape_cast %17 : vector<1x2x16xf32> to vector<2x16xf32>
    %19 = vector.shape_cast %16 : vector<2x16xf32> to vector<1x2x16xf32>
    tpu.vector_store %arg9[%c0_16, %c0_17, %c0_18], %19 {strides = array<i32>} : memref<1x2x16xf32, #tpu.memory_space<vmem>>, vector<1x2x16xf32>,
    return
  }
  func.func @transform_0(%arg0: i32, %arg1: i32) -> (i32, i32, i32) {
    %c0_i32 = arith.constant 0 : i32
    %c0_i32_0 = arith.constant 0 : i32
    return %arg0, %c0_i32, %arg1 : i32, i32, i32
  }
  func.func @transform_1(%arg0: i32, %arg1: i32) -> (i32, i32) {
    %c0_i32 = arith.constant 0 : i32
    %c0_i32_0 = arith.constant 0 : i32
    %c0_i32_1 = arith.constant 0 : i32
    return %c0_i32, %c0_i32_0 : i32, i32
  }
  func.func @transform_2(%arg0: i32, %arg1: i32) -> (i32, i32) {
    %c0_i32 = arith.constant 0 : i32
    %c0_i32_0 = arith.constant 0 : i32
    %c0_i32_1 = arith.constant 0 : i32
    return %c0_i32, %c0_i32_0 : i32, i32
  }
  func.func @transform_3(%arg0: i32, %arg1: i32) -> (i32, i32) {
    %c0_i32 = arith.constant 0 : i32
    %c0_i32_0 = arith.constant 0 : i32
    %c0_i32_1 = arith.constant 0 : i32
    return %c0_i32, %c0_i32_0 : i32, i32
  }
  func.func @transform_4(%arg0: i32, %arg1: i32) -> (i32, i32) {
    %c0_i32 = arith.constant 0 : i32
    %c0_i32_0 = arith.constant 0 : i32
    %c0_i32_1 = arith.constant 0 : i32
    return %c0_i32, %c0_i32_0 : i32, i32
  }
  func.func @transform_5(%arg0: i32, %arg1: i32) -> (i32, i32) {
    %c0_i32 = arith.constant 0 : i32
    %c0_i32_0 = arith.constant 0 : i32
    %c0_i32_1 = arith.constant 0 : i32
    return %c0_i32, %c0_i32_0 : i32, i32
  }
  func.func @transform_6(%arg0: i32, %arg1: i32) -> (i32, i32) {
    %c0_i32 = arith.constant 0 : i32
    %c0_i32_0 = arith.constant 0 : i32
    %c0_i32_1 = arith.constant 0 : i32
    return %c0_i32, %c0_i32_0 : i32, i32
  }
  func.func @transform_7(%arg0: i32, %arg1: i32) -> (i32, i32, i32) {
    %c0_i32 = arith.constant 0 : i32
    %c0_i32_0 = arith.constant 0 : i32
    return %arg0, %c0_i32, %arg1 : i32, i32, i32
  }
}

</mosaic_0001>

<llo_original>
// kernel: tpu_custom_call.1
$region0: #{tpu_custom_call.1}
  #allocation0 [shape = 'u32[]', space=smem, size = 0x4, offset = 0x4, fixed_abs, tag = 'smem constant byte address 0x4 - core index']
  #allocation1 [shape = 'u32[144,128]{1,0:T(1,128)}', space=vmem, size = 0x12000, scoped, tag = 'internal scratch']
  %s0 = inlined_call_operand.vmem [shape: f32[2,4,16], index: 0, kind: input, shape index: {}]
  %s1 = inlined_call_operand.vmem [shape: f32[8,4], index: 1, kind: input, shape index: {}]
  %s2 = inlined_call_operand.vmem [shape: f32[8,1], index: 2, kind: input, shape index: {}]
  %s3 = inlined_call_operand.vmem [shape: f32[4,8], index: 3, kind: input, shape index: {}]
  %s4 = inlined_call_operand.vmem [shape: f32[4,1], index: 4, kind: input, shape index: {}]
  %s5 = inlined_call_operand.vmem [shape: f32[2,4], index: 5, kind: input, shape index: {}]
  %s6 = inlined_call_operand.vmem [shape: f32[2,1], index: 6, kind: input, shape index: {}]
  %s7 = inlined_call_operand.hbm [shape: f32[2,2,16], index: 7, kind: output, shape index: {}]
  %s8 = sld [smem:[#allocation0]]
  $region61: #{tpu_custom_call.1} parent=0
    _
  %s10 = ssub.s32 1, %s8
  %s11 = scalar_select 0, %s10, %s8
  $region1: #{tpu_custom_call.1} parent=0
    #allocation2 [shape = 'u8[2048]{0}', space=vmem, size = 0x800, scoped, tag = 'output window, operand 0']
    #allocation3 [shape = 's32[2]{0}', space=sflag, size = 0x8, scoped, tag = 'scoped memory for tpu_custom_call.1']
    %12 = vsyncpa [#allocation3], 0
    %s13 = scalar_lea.sflag [#allocation3], 1
    %14 = vsyncpa %s13, 0
    loop: start=0, step=1, limit=4
    $region2: #{tpu_custom_call.1} parent=1 // loop_pre_header
      _
    $region3: #{tpu_custom_call.1} parent=1 // loop_header
      %s16 = sphi 0, %s20
      %p17 = scmp.ge.s32.totalorder %s16, 4
      %s23 = sphi 0, %s35
      %s24 = sphi 0, %s31
      %s25 = sphi 0, %s23
      %s26 = sphi 0, %s24
      %s27 = sphi 0, %s25
      %s28 = sphi 0, %s26
      %s40 = sphi 0, %s42
      %s43 = sphi 0, %s40
      %s44 = sphi 0, %s43
      %s60 = sphi 0, %s44
      %s64 = sphi 0, %s64
      %s66 = sphi 0, %s64
      %s67 = sphi 0, %s66
      %s81 = sphi 0, %s67
      %s85 = sphi 0, %s85
      %s87 = sphi 0, %s85
      %s88 = sphi 0, %s87
      %s102 = sphi 0, %s88
      %s106 = sphi 0, %s106
      %s108 = sphi 0, %s106
      %s109 = sphi 0, %s108
      %s123 = sphi 0, %s109
      %s127 = sphi 0, %s127
      %s129 = sphi 0, %s127
      %s130 = sphi 0, %s129
      %s144 = sphi 0, %s130
      %s148 = sphi 0, %s148
      %s150 = sphi 0, %s148
      %s151 = sphi 0, %s150
      %s165 = sphi 0, %s151
      %s169 = sphi 0, %s169
      %s171 = sphi 0, %s169
      %s172 = sphi 0, %s171
      %s186 = sphi 0, %s172
      %s194 = sphi 0, %s196
      %s197 = sphi 0, %s194
      %s198 = sphi 0, %s197
      %s214 = sphi 0, %s198
    $region4: #{tpu_custom_call.1} parent=1 // loop_header_branch
      %19 = sbr.rel (%p17) target = $region8
    $region5: #{tpu_custom_call.1} parent=1 // loop_body
      %s21 = ssub.s32 %s16, 1
      %s22 = ssub.s32 %s16, 2
      %s29 = sadd.s32 1, %s24
      %p30 = scmp.ge.s32.totalorder %s29, 1
      %s31 = scalar_select %p30, 0, %s29
      %s32 = sadd.s32 1, %s23
      %s33 = scalar_select %p30, %s32, %s23
      %p34 = scmp.ge.s32.totalorder %s33, 2
      %s35 = scalar_select %p34, 0, %s33
      %s36 = ssub.s32 %s23, %s35
      %s37 = ssub.s32 %s24, %s31
      %s38 = sor.u32 %s36, %s37
      %p39 = scmp.eq.s32.totalorder %s38, 0
      %s41 = sadd.s32 %s40, 1
      %s42 = scalar_select %p39, %s40, %s41
      %p45 = pneg %p39
      %p46 = scmp.eq.s32.totalorder %s16, 1
      %p47 = por %p45, %p46
      %p48 = scmp.ne.s32.totalorder %s40, %s43
      %p49 = scmp.eq.s32.totalorder %s16, 0
      %p50 = por %p48, %p49
      %p51 = scmp.ne.s32.totalorder %s40, %s43
      %p52 = scmp.eq.s32.totalorder %s21, 1
      %p53 = por %p51, %p52
      %p54 = scmp.ne.s32.totalorder %s43, %s44
      %p55 = scmp.eq.s32.totalorder %s21, 0
      %p56 = por %p54, %p55
      %p57 = scmp.ne.s32.totalorder %s43, %s44
      %p58 = scmp.eq.s32.totalorder %s22, 1
      %p59 = por %p57, %p58
      %p61 = scmp.ne.s32.totalorder %s44, %s60
      %p62 = scmp.eq.s32.totalorder %s22, 0
      %p63 = por %p61, %p62
      %s65 = sadd.s32 %s64, 1
      %p68 = scmp.eq.s32.totalorder %s16, 1
      %p69 = scmp.ne.s32.totalorder %s64, %s66
      %p70 = scmp.eq.s32.totalorder %s16, 0
      %p71 = por %p69, %p70
      %p72 = scmp.ne.s32.totalorder %s64, %s66
      %p73 = scmp.eq.s32.totalorder %s21, 1
      %p74 = por %p72, %p73
      %p75 = scmp.ne.s32.totalorder %s66, %s67
      %p76 = scmp.eq.s32.totalorder %s21, 0
      %p77 = por %p75, %p76
      %p78 = scmp.ne.s32.totalorder %s66, %s67
      %p79 = scmp.eq.s32.totalorder %s22, 1
      %p80 = por %p78, %p79
      %p82 = scmp.ne.s32.totalorder %s67, %s81
      %p83 = scmp.eq.s32.totalorder %s22, 0
      %p84 = por %p82, %p83
      %s86 = sadd.s32 %s85, 1
      %p89 = scmp.eq.s32.totalorder %s16, 1
      %p90 = scmp.ne.s32.totalorder %s85, %s87
      %p91 = scmp.eq.s32.totalorder %s16, 0
      %p92 = por %p90, %p91
      %p93 = scmp.ne.s32.totalorder %s85, %s87
      %p94 = scmp.eq.s32.totalorder %s21, 1
      %p95 = por %p93, %p94
      %p96 = scmp.ne.s32.totalorder %s87, %s88
      %p97 = scmp.eq.s32.totalorder %s21, 0
      %p98 = por %p96, %p97
      %p99 = scmp.ne.s32.totalorder %s87, %s88
      %p100 = scmp.eq.s32.totalorder %s22, 1
      %p101 = por %p99, %p100
      %p103 = scmp.ne.s32.totalorder %s88, %s102
      %p104 = scmp.eq.s32.totalorder %s22, 0
      %p105 = por %p103, %p104
      %s107 = sadd.s32 %s106, 1
      %p110 = scmp.eq.s32.totalorder %s16, 1
      %p111 = scmp.ne.s32.totalorder %s106, %s108
      %p112 = scmp.eq.s32.totalorder %s16, 0
      %p113 = por %p111, %p112
      %p114 = scmp.ne.s32.totalorder %s106, %s108
      %p115 = scmp.eq.s32.totalorder %s21, 1
      %p116 = por %p114, %p115
      %p117 = scmp.ne.s32.totalorder %s108, %s109
      %p118 = scmp.eq.s32.totalorder %s21, 0
      %p119 = por %p117, %p118
      %p120 = scmp.ne.s32.totalorder %s108, %s109
      %p121 = scmp.eq.s32.totalorder %s22, 1
      %p122 = por %p120, %p121
      %p124 = scmp.ne.s32.totalorder %s109, %s123
      %p125 = scmp.eq.s32.totalorder %s22, 0
      %p126 = por %p124, %p125
      %s128 = sadd.s32 %s127, 1
      %p131 = scmp.eq.s32.totalorder %s16, 1
      %p132 = scmp.ne.s32.totalorder %s127, %s129
      %p133 = scmp.eq.s32.totalorder %s16, 0
      %p134 = por %p132, %p133
      %p135 = scmp.ne.s32.totalorder %s127, %s129
      %p136 = scmp.eq.s32.totalorder %s21, 1
      %p137 = por %p135, %p136
      %p138 = scmp.ne.s32.totalorder %s129, %s130
      %p139 = scmp.eq.s32.totalorder %s21, 0
      %p140 = por %p138, %p139
      %p141 = scmp.ne.s32.totalorder %s129, %s130
      %p142 = scmp.eq.s32.totalorder %s22, 1
      %p143 = por %p141, %p142
      %p145 = scmp.ne.s32.totalorder %s130, %s144
      %p146 = scmp.eq.s32.totalorder %s22, 0
      %p147 = por %p145, %p146
      %s149 = sadd.s32 %s148, 1
      %p152 = scmp.eq.s32.totalorder %s16, 1
      %p153 = scmp.ne.s32.totalorder %s148, %s150
      %p154 = scmp.eq.s32.totalorder %s16, 0
      %p155 = por %p153, %p154
      %p156 = scmp.ne.s32.totalorder %s148, %s150
      %p157 = scmp.eq.s32.totalorder %s21, 1
      %p158 = por %p156, %p157
      %p159 = scmp.ne.s32.totalorder %s150, %s151
      %p160 = scmp.eq.s32.totalorder %s21, 0
      %p161 = por %p159, %p160
      %p162 = scmp.ne.s32.totalorder %s150, %s151
      %p163 = scmp.eq.s32.totalorder %s22, 1
      %p164 = por %p162, %p163
      %p166 = scmp.ne.s32.totalorder %s151, %s165
      %p167 = scmp.eq.s32.totalorder %s22, 0
      %p168 = por %p166, %p167
      %s170 = sadd.s32 %s169, 1
      %p173 = scmp.eq.s32.totalorder %s16, 1
      %p174 = scmp.ne.s32.totalorder %s169, %s171
      %p175 = scmp.eq.s32.totalorder %s16, 0
      %p176 = por %p174, %p175
      %p177 = scmp.ne.s32.totalorder %s169, %s171
      %p178 = scmp.eq.s32.totalorder %s21, 1
      %p179 = por %p177, %p178
      %p180 = scmp.ne.s32.totalorder %s171, %s172
      %p181 = scmp.eq.s32.totalorder %s21, 0
      %p182 = por %p180, %p181
      %p183 = scmp.ne.s32.totalorder %s171, %s172
      %p184 = scmp.eq.s32.totalorder %s22, 1
      %p185 = por %p183, %p184
      %p187 = scmp.ne.s32.totalorder %s172, %s186
      %p188 = scmp.eq.s32.totalorder %s22, 0
      %p189 = por %p187, %p188
      %s190 = ssub.s32 %s23, %s35
      %s191 = ssub.s32 %s24, %s31
      %s192 = sor.u32 %s190, %s191
      %p193 = scmp.eq.s32.totalorder %s192, 0
      %s195 = sadd.s32 %s194, 1
      %s196 = scalar_select %p193, %s194, %s195
      %p199 = pneg %p193
      %p200 = scmp.eq.s32.totalorder %s16, 1
      %p201 = por %p199, %p200
      %p202 = scmp.ne.s32.totalorder %s194, %s197
      %p203 = scmp.eq.s32.totalorder %s16, 0
      %p204 = por %p202, %p203
      %p205 = scmp.ne.s32.totalorder %s194, %s197
      %p206 = scmp.eq.s32.totalorder %s21, 1
      %p207 = por %p205, %p206
      %p208 = scmp.ne.s32.totalorder %s197, %s198
      %p209 = scmp.eq.s32.totalorder %s21, 0
      %p210 = por %p208, %p209
      %p211 = scmp.ne.s32.totalorder %s197, %s198
      %p212 = scmp.eq.s32.totalorder %s22, 1
      %p213 = por %p211, %p212
      %p215 = scmp.ne.s32.totalorder %s198, %s214
      %p216 = scmp.eq.s32.totalorder %s22, 0
      %p217 = por %p215, %p216
      %p218 = scmp.le.s32.totalorder 1, %s16
      %p219 = scmp.lt.s32.totalorder %s16, 3
      %p220 = pnand %p218, %p219
      %p221 = pneg %p220
      // Predicated region
      $region9: #{tpu_custom_call.1} parent=5 // pred_check
        _
      $region10: #{tpu_custom_call.1} parent=5 // pred_check_branch
        %223 = sbr.rel (%p220) target = $region12
      $region11: #{tpu_custom_call.1} parent=5 // pred_region
        %s224 = ssub.s32 %s16, 1
        // Predicated region
        $region13: #{tpu_custom_call.1} parent=11 // pred_check
          %p225 = pneg %p77
        $region14: #{tpu_custom_call.1} parent=11 // pred_check_branch
          %227 = sbr.rel (%p225) target = $region16
        $region15: #{tpu_custom_call.1} parent=11 // pred_region
          _
        $region16: #{tpu_custom_call.1} parent=11 // pred_fallthru
          _
        // Predicated region
        $region17: #{tpu_custom_call.1} parent=11 // pred_check
          %p228 = pneg %p98
        $region18: #{tpu_custom_call.1} parent=11 // pred_check_branch
          %230 = sbr.rel (%p228) target = $region20
        $region19: #{tpu_custom_call.1} parent=11 // pred_region
          _
        $region20: #{tpu_custom_call.1} parent=11 // pred_fallthru
          _
        // Predicated region
        $region21: #{tpu_custom_call.1} parent=11 // pred_check
          %p231 = pneg %p119
        $region22: #{tpu_custom_call.1} parent=11 // pred_check_branch
          %233 = sbr.rel (%p231) target = $region24
        $region23: #{tpu_custom_call.1} parent=11 // pred_region
          _
        $region24: #{tpu_custom_call.1} parent=11 // pred_fallthru
          _
        // Predicated region
        $region25: #{tpu_custom_call.1} parent=11 // pred_check
          %p234 = pneg %p140
        $region26: #{tpu_custom_call.1} parent=11 // pred_check_branch
          %236 = sbr.rel (%p234) target = $region28
        $region27: #{tpu_custom_call.1} parent=11 // pred_region
          _
        $region28: #{tpu_custom_call.1} parent=11 // pred_fallthru
          _
        // Predicated region
        $region29: #{tpu_custom_call.1} parent=11 // pred_check
          %p237 = pneg %p161
        $region30: #{tpu_custom_call.1} parent=11 // pred_check_branch
          %239 = sbr.rel (%p237) target = $region32
        $region31: #{tpu_custom_call.1} parent=11 // pred_region
          _
        $region32: #{tpu_custom_call.1} parent=11 // pred_fallthru
          _
        // Predicated region
        $region33: #{tpu_custom_call.1} parent=11 // pred_check
          %p240 = pneg %p182
        $region34: #{tpu_custom_call.1} parent=11 // pred_check_branch
          %242 = sbr.rel (%p240) target = $region36
        $region35: #{tpu_custom_call.1} parent=11 // pred_region
          _
        $region36: #{tpu_custom_call.1} parent=11 // pred_fallthru
          _
      $region12: #{tpu_custom_call.1} parent=5 // pred_fallthru
        _
      %p243 = scmp.lt.s32.totalorder %s16, 2
      // Predicated region
      $region37: #{tpu_custom_call.1} parent=5 // pred_check
        %p244 = pneg %p243
      $region38: #{tpu_custom_call.1} parent=5 // pred_check_branch
        %246 = sbr.rel (%p244) target = $region40
      $region39: #{tpu_custom_call.1} parent=5 // pred_region
        // Predicated region
        $region41: #{tpu_custom_call.1} parent=39 // pred_check
          %p247 = pneg %p50
        $region42: #{tpu_custom_call.1} parent=39 // pred_check_branch
          %249 = sbr.rel (%p247) target = $region44
        $region43: #{tpu_custom_call.1} parent=39 // pred_region
          %p250 = scmp.lt.s32.totalorder %s23, 1
          %s251 = scalar_select %p250, %s23, 1
          %p252 = scmp.lt.s32.totalorder %s24, 0
          %s253 = scalar_select %p252, %s24, 0
          %s254 = sadd.s32 %s253, %s251
          %s255 = smul.addr %s254, 4
          %s256 = scalar_lea.vmem %s0, %s255
        $region44: #{tpu_custom_call.1} parent=39 // pred_fallthru
          _
      $region40: #{tpu_custom_call.1} parent=5 // pred_fallthru
        _
      %p257 = scmp.le.s32.totalorder 1, %s16
      %p258 = scmp.lt.s32.totalorder %s16, 3
      %p259 = pnand %p257, %p258
      %p260 = pneg %p259
      // Predicated region
      $region45: #{tpu_custom_call.1} parent=5 // pred_check
        _
      $region46: #{tpu_custom_call.1} parent=5 // pred_check_branch
        %262 = sbr.rel (%p259) target = $region48
      $region47: #{tpu_custom_call.1} parent=5 // pred_region
        %s263 = ssub.s32 %s16, 1
        %p264 = scmp.lt.s32.totalorder %s25, 1
        %s265 = scalar_select %p264, %s25, 1
        %p266 = scmp.lt.s32.totalorder %s26, 0
        %s267 = scalar_select %p266, %s26, 0
        %s268 = sadd.s32 %s267, %s265
        %s269 = smul.addr %s268, 4
        %s270 = scalar_lea.vmem %s0, %s269
        %p271 = pneg %p56
        %p272 = pneg %p53
        %p273 = pneg %p77
        %p274 = pneg %p74
        %p275 = pneg %p98
        %p276 = pneg %p95
        %p277 = pneg %p119
        %p278 = pneg %p116
        %p279 = pneg %p140
        %p280 = pneg %p137
        %p281 = pneg %p161
        %p282 = pneg %p158
        %p283 = pneg %p182
        %p284 = pneg %p179
        %p285 = pneg %p210
        %p286 = pneg %p207
        %s287 = sand.u32 %s197, 1
        %s288 = scalar_lea.sflag [#allocation3], %s287
        %s289 = sand.u32 %s197, 1
        %s290 = smul.addr %s289, 2
        %s291 = scalar_lea.vmem [#allocation2], %s290
        %p292 = scmp.lt.s32.totalorder %s25, 1
        %s293 = scalar_select %p292, %s25, 1
        %p294 = scmp.lt.s32.totalorder %s26, 0
        %s295 = scalar_select %p294, %s26, 0
        %s296 = sadd.s32 %s295, %s293
        %s297 = smul.addr %s296, 4
        %s298 = scalar_lea.vmem %s0, %s297
        %v299 = vld [vmem:[%s298] sm:$0xf]
        %v300 = vld [vmem:[%s1] sm:$0xff]
        %v301 = vld [vmem:[%s2] sm:$0xff]
        %303 = vset.pattern.permute.xlu0 0
        %304 = vperm.xlu0 %303, %v301
        %v305 = vpop.permute.xlu0 %304
        %vm307 = vcmask 31744
        %v309 = vsel %vm307, %v300, 0
        %vm311 = vcmask 1043456
        %v313 = vsel %vm311, %v299, 0
        %315 = vmatprep.subr.mxu0 0.0
        %316 = vmatpush1.msra.mxu0 %v313
        %317 = vmatprep.subr.mxu0 0.0
        %318 = vmatpush1.msra.mxu0 0.0
        %319 = vmatprep.subr.mxu0 0.0
        %320 = vmatpush1.msra.mxu0 0.0
        %321 = vmatprep.subr.mxu0 0.0
        %322 = vmatpush1.msra.mxu0 0.0
        %323 = vmatprep.subr.mxu0 0.0
        %324 = vmatpush1.msra.mxu0 0.0
        %325 = vmatprep.subr.mxu0 0.0
        %326 = vmatpush1.msra.mxu0 0.0
        %327 = vmatprep.subr.mxu0 0.0
        %328 = vmatpush1.msra.mxu0 0.0
        %329 = vmatprep.subr.mxu0 0.0
        %330 = vmatpush1.msra.mxu0 0.0
        %331 = vmatprep.subr.mxu0 0.0
        %332 = vmatpush1.msra.mxu0 0.0
        %333 = vmatprep.subr.mxu0 0.0
        %334 = vmatpush1.msra.mxu0 0.0
        %335 = vmatprep.subr.mxu0 0.0
        %336 = vmatpush1.msra.mxu0 0.0
        %337 = vmatprep.subr.mxu0 0.0
        %338 = vmatpush1.msra.mxu0 0.0
        %339 = vmatprep.subr.mxu0 0.0
        %340 = vmatpush1.msra.mxu0 0.0
        %341 = vmatprep.subr.mxu0 0.0
        %342 = vmatpush1.msra.mxu0 0.0
        %343 = vmatprep.subr.mxu0 0.0
        %344 = vmatpush1.msra.mxu0 0.0
        %345 = vmatprep.subr.mxu0 0.0
        %346 = vmatpush1.msra.mxu0 0.0
        %347 = vmatprep.subr.mxu0 0.0
        %348 = vmatpush1.msra.mxu0 0.0
        %349 = vmatprep.subr.mxu0 0.0
        %350 = vmatpush1.msra.mxu0 0.0
        %351 = vmatprep.subr.mxu0 0.0
        %352 = vmatpush1.msra.mxu0 0.0
        %353 = vmatprep.subr.mxu0 0.0
        %354 = vmatpush1.msra.mxu0 0.0
        %355 = vmatprep.subr.mxu0 0.0
        %356 = vmatpush1.msra.mxu0 0.0
        %357 = vmatprep.subr.mxu0 0.0
        %358 = vmatpush1.msra.mxu0 0.0
        %359 = vmatprep.subr.mxu0 0.0
        %360 = vmatpush1.msra.mxu0 0.0
        %361 = vmatprep.subr.mxu0 0.0
        %362 = vmatpush1.msra.mxu0 0.0
        %363 = vmatprep.subr.mxu0 0.0
        %364 = vmatpush1.msra.mxu0 0.0
        %365 = vmatprep.subr.mxu0 0.0
        %366 = vmatpush1.msra.mxu0 0.0
        %367 = vmatprep.subr.mxu0 0.0
        %368 = vmatpush1.msra.mxu0 0.0
        %369 = vmatprep.subr.mxu0 0.0
        %370 = vmatpush1.msra.mxu0 0.0
        %371 = vmatprep.subr.mxu0 0.0
        %372 = vmatpush1.msra.mxu0 0.0
        %373 = vmatprep.subr.mxu0 0.0
        %374 = vmatpush1.msra.mxu0 0.0
        %375 = vmatprep.subr.mxu0 0.0
        %376 = vmatpush1.msra.mxu0 0.0
        %377 = vmatprep.subr.mxu0 0.0
        %378 = vmatpush1.msra.mxu0 0.0
        %379 = vmatprep.mubr.f32.mxu0 0.0
        %380 = vmatmul.mubr.f32.gmra.mrb[0].mxu0 %v309
        %v381 = vpop.f32.mrb[0].mxu0
        %v382 = vadd.f32 %v305, %v381
        %v383 = vpop.f32.mrb[0].mxu0
        %384 = vdwg.mxu0
        %v385 = vld [vmem:[%s3] sm:$0xf]
        %v386 = vld [vmem:[%s4] sm:$0xf]
        %388 = vset.pattern.permute.xlu0 0
        %389 = vperm.xlu0 %388, %v386
        %v390 = vpop.permute.xlu0 %389
        %vm392 = vcmask 64512
        %v394 = vsel %vm392, %v385, 0
        %396 = vmatprep.subr.mxu0 0.0
        %397 = vmatpush1.msra.mxu0 %v382
        %398 = vmatprep.subr.mxu0 0.0
        %399 = vmatpush1.msra.mxu0 0.0
        %400 = vmatprep.subr.mxu0 0.0
        %401 = vmatpush1.msra.mxu0 0.0
        %402 = vmatprep.subr.mxu0 0.0
        %403 = vmatpush1.msra.mxu0 0.0
        %404 = vmatprep.subr.mxu0 0.0
        %405 = vmatpush1.msra.mxu0 0.0
        %406 = vmatprep.subr.mxu0 0.0
        %407 = vmatpush1.msra.mxu0 0.0
        %408 = vmatprep.subr.mxu0 0.0
        %409 = vmatpush1.msra.mxu0 0.0
        %410 = vmatprep.subr.mxu0 0.0
        %411 = vmatpush1.msra.mxu0 0.0
        %412 = vmatprep.subr.mxu0 0.0
        %413 = vmatpush1.msra.mxu0 0.0
        %414 = vmatprep.subr.mxu0 0.0
        %415 = vmatpush1.msra.mxu0 0.0
        %416 = vmatprep.subr.mxu0 0.0
        %417 = vmatpush1.msra.mxu0 0.0
        %418 = vmatprep.subr.mxu0 0.0
        %419 = vmatpush1.msra.mxu0 0.0
        %420 = vmatprep.subr.mxu0 0.0
        %421 = vmatpush1.msra.mxu0 0.0
        %422 = vmatprep.subr.mxu0 0.0
        %423 = vmatpush1.msra.mxu0 0.0
        %424 = vmatprep.subr.mxu0 0.0
        %425 = vmatpush1.msra.mxu0 0.0
        %426 = vmatprep.subr.mxu0 0.0
        %427 = vmatpush1.msra.mxu0 0.0
        %428 = vmatprep.subr.mxu0 0.0
        %429 = vmatpush1.msra.mxu0 0.0
        %430 = vmatprep.subr.mxu0 0.0
        %431 = vmatpush1.msra.mxu0 0.0
        %432 = vmatprep.subr.mxu0 0.0
        %433 = vmatpush1.msra.mxu0 0.0
        %434 = vmatprep.subr.mxu0 0.0
        %435 = vmatpush1.msra.mxu0 0.0
        %436 = vmatprep.subr.mxu0 0.0
        %437 = vmatpush1.msra.mxu0 0.0
        %438 = vmatprep.subr.mxu0 0.0
        %439 = vmatpush1.msra.mxu0 0.0
        %440 = vmatprep.subr.mxu0 0.0
        %441 = vmatpush1.msra.mxu0 0.0
        %442 = vmatprep.subr.mxu0 0.0
        %443 = vmatpush1.msra.mxu0 0.0
        %444 = vmatprep.subr.mxu0 0.0
        %445 = vmatpush1.msra.mxu0 0.0
        %446 = vmatprep.subr.mxu0 0.0
        %447 = vmatpush1.msra.mxu0 0.0
        %448 = vmatprep.subr.mxu0 0.0
        %449 = vmatpush1.msra.mxu0 0.0
        %450 = vmatprep.subr.mxu0 0.0
        %451 = vmatpush1.msra.mxu0 0.0
        %452 = vmatprep.subr.mxu0 0.0
        %453 = vmatpush1.msra.mxu0 0.0
        %454 = vmatprep.subr.mxu0 0.0
        %455 = vmatpush1.msra.mxu0 0.0
        %456 = vmatprep.subr.mxu0 0.0
        %457 = vmatpush1.msra.mxu0 0.0
        %458 = vmatprep.subr.mxu0 0.0
        %459 = vmatpush1.msra.mxu0 0.0
        %460 = vmatprep.mubr.f32.mxu0 0.0
        %461 = vmatmul.mubr.f32.gmra.mrb[0].mxu0 %v394
        %v462 = vpop.f32.mrb[0].mxu0
        %v463 = vadd.f32 %v390, %v462
        %v464 = vpop.f32.mrb[0].mxu0
        %465 = vdwg.mxu0
        %v466 = vld [vmem:[%s5] sm:$0x3]
        %v467 = vld [vmem:[%s6] sm:$0x3]
        %469 = vset.pattern.permute.xlu0 0
        %470 = vperm.xlu0 %469, %v467
        %v471 = vpop.permute.xlu0 %470
        %v474 = vsel %vm307, %v466, 0
        %v477 = vsel %vm311, %v463, 0
        %479 = vmatprep.subr.mxu0 0.0
        %480 = vmatpush1.msra.mxu0 %v477
        %481 = vmatprep.subr.mxu0 0.0
        %482 = vmatpush1.msra.mxu0 0.0
        %483 = vmatprep.subr.mxu0 0.0
        %484 = vmatpush1.msra.mxu0 0.0
        %485 = vmatprep.subr.mxu0 0.0
        %486 = vmatpush1.msra.mxu0 0.0
        %487 = vmatprep.subr.mxu0 0.0
        %488 = vmatpush1.msra.mxu0 0.0
        %489 = vmatprep.subr.mxu0 0.0
        %490 = vmatpush1.msra.mxu0 0.0
        %491 = vmatprep.subr.mxu0 0.0
        %492 = vmatpush1.msra.mxu0 0.0
        %493 = vmatprep.subr.mxu0 0.0
        %494 = vmatpush1.msra.mxu0 0.0
        %495 = vmatprep.subr.mxu0 0.0
        %496 = vmatpush1.msra.mxu0 0.0
        %497 = vmatprep.subr.mxu0 0.0
        %498 = vmatpush1.msra.mxu0 0.0
        %499 = vmatprep.subr.mxu0 0.0
        %500 = vmatpush1.msra.mxu0 0.0
        %501 = vmatprep.subr.mxu0 0.0
        %502 = vmatpush1.msra.mxu0 0.0
        %503 = vmatprep.subr.mxu0 0.0
        %504 = vmatpush1.msra.mxu0 0.0
        %505 = vmatprep.subr.mxu0 0.0
        %506 = vmatpush1.msra.mxu0 0.0
        %507 = vmatprep.subr.mxu0 0.0
        %508 = vmatpush1.msra.mxu0 0.0
        %509 = vmatprep.subr.mxu0 0.0
        %510 = vmatpush1.msra.mxu0 0.0
        %511 = vmatprep.subr.mxu0 0.0
        %512 = vmatpush1.msra.mxu0 0.0
        %513 = vmatprep.subr.mxu0 0.0
        %514 = vmatpush1.msra.mxu0 0.0
        %515 = vmatprep.subr.mxu0 0.0
        %516 = vmatpush1.msra.mxu0 0.0
        %517 = vmatprep.subr.mxu0 0.0
        %518 = vmatpush1.msra.mxu0 0.0
        %519 = vmatprep.subr.mxu0 0.0
        %520 = vmatpush1.msra.mxu0 0.0
        %521 = vmatprep.subr.mxu0 0.0
        %522 = vmatpush1.msra.mxu0 0.0
        %523 = vmatprep.subr.mxu0 0.0
        %524 = vmatpush1.msra.mxu0 0.0
        %525 = vmatprep.subr.mxu0 0.0
        %526 = vmatpush1.msra.mxu0 0.0
        %527 = vmatprep.subr.mxu0 0.0
        %528 = vmatpush1.msra.mxu0 0.0
        %529 = vmatprep.subr.mxu0 0.0
        %530 = vmatpush1.msra.mxu0 0.0
        %531 = vmatprep.subr.mxu0 0.0
        %532 = vmatpush1.msra.mxu0 0.0
        %533 = vmatprep.subr.mxu0 0.0
        %534 = vmatpush1.msra.mxu0 0.0
        %535 = vmatprep.subr.mxu0 0.0
        %536 = vmatpush1.msra.mxu0 0.0
        %537 = vmatprep.subr.mxu0 0.0
        %538 = vmatpush1.msra.mxu0 0.0
        %539 = vmatprep.subr.mxu0 0.0
        %540 = vmatpush1.msra.mxu0 0.0
        %541 = vmatprep.subr.mxu0 0.0
        %542 = vmatpush1.msra.mxu0 0.0
        %543 = vmatprep.mubr.f32.mxu0 0.0
        %544 = vmatmul.mubr.f32.gmra.mrb[0].mxu0 %v474
        %v545 = vpop.f32.mrb[0].mxu0
        %v546 = vadd.f32 %v471, %v545
        %v547 = vpop.f32.mrb[0].mxu0
        %548 = vdwg.mxu0
        %vm549 = vcmask 123904
        %550 = vst.msk [vmem:[%s291] sm:$0x3] %vm549, %v546
        %s551 = sand.u32 %s197, 1
        %s552 = scalar_lea.sflag [#allocation3], %s551
        %s553 = sand.u32 %s197, 1
        %s554 = smul.addr %s553, 2
        %s555 = scalar_lea.vmem [#allocation2], %s554
        // Predicated region
        $region49: #{tpu_custom_call.1} parent=47 // pred_check
          %p556 = pneg %p207
        $region50: #{tpu_custom_call.1} parent=47 // pred_check_branch
          %558 = sbr.rel (%p556) target = $region52
        $region51: #{tpu_custom_call.1} parent=47 // pred_region
          %s560 = ssub.s32 32, 32
          %561 = vsyncadd %s552, %s560
          %s562 = sadd.s32 %s26, %s25
          %s563 = smul.addr %s562, 32
          %s564 = scalar_lea.hbm %s7, %s563
          %s566 = sshll.u32 %s555, 4
          %s567 = int_to_ptr.vmem [resolvable:$true] %s566
          %569 = dma.vmem_to_hbm [thread:$0]  %s567, 32, %s564, %s552
        $region52: #{tpu_custom_call.1} parent=47 // pred_fallthru
          _
      $region48: #{tpu_custom_call.1} parent=5 // pred_fallthru
        _
      %p570 = scmp.le.s32.totalorder 2, %s16
      // Predicated region
      $region53: #{tpu_custom_call.1} parent=5 // pred_check
        %p571 = pneg %p570
      $region54: #{tpu_custom_call.1} parent=5 // pred_check_branch
        %573 = sbr.rel (%p571) target = $region56
      $region55: #{tpu_custom_call.1} parent=5 // pred_region
        %s574 = ssub.s32 %s16, 2
        // Predicated region
        $region57: #{tpu_custom_call.1} parent=55 // pred_check
          %p575 = pneg %p213
        $region58: #{tpu_custom_call.1} parent=55 // pred_check_branch
          %577 = sbr.rel (%p575) target = $region60
        $region59: #{tpu_custom_call.1} parent=55 // pred_region
          %s578 = sand.u32 %s198, 1
          %s579 = scalar_lea.sflag [#allocation3], %s578
          %s580 = sand.u32 %s198, 1
          %s581 = smul.addr %s580, 2
          %s582 = scalar_lea.vmem [#allocation2], %s581
          %583 = dma.done %s579, 32
        $region60: #{tpu_custom_call.1} parent=55 // pred_fallthru
          _
      $region56: #{tpu_custom_call.1} parent=5 // pred_fallthru
        _
    $region6: #{tpu_custom_call.1} parent=1 // loop_footer
      %s20 = sadd.s32 1, %s16
    $region7: #{tpu_custom_call.1} parent=1 // loop_footer_branch
      %15 = sbr.rel target = $region3
    $region8: #{tpu_custom_call.1} parent=1 // loop_exit
      _
    %584 = vsyncpa [#allocation3], 1
    %s585 = scalar_lea.sflag [#allocation3], 1
    %586 = vsyncpa %s585, 1

</llo_original>
